<compile_context>
chip_gen: v7x
topology: tpu7x:2x2x1
jax: 0.10.0
libtpu: 0.0.40
codegen_flags: <defaults>
</compile_context>

<pallas_src>
import math

import jax
import jax.numpy as jnp
from jax.experimental import pallas as pl
from jax.experimental.pallas import tpu as pltpu

LAYER_NORM_EPS = 1e-12
_SQRT2 = math.sqrt(2.0)


def _fused_mlm_head_kernel(x_ref, w1_ref, b1_ref, gamma_ref, beta_ref,
                           wd_ref, dbias_ref, o_ref, h_ref):
    """Fused transform + decoder.

    x_ref     : [tm, H]  bf16   input rows (resident across the V axis)
    w1_ref    : [H, H]   bf16   dense weight (pre-transposed), resident
    b1/gamma/beta : [1, H] f32
    wd_ref    : [H, tv]  bf16   decoder weight slab for this vocab tile
    dbias_ref : [1, tv]  f32
    o_ref     : [tm, tv]        prediction scores tile
    h_ref     : [tm, H]  bf16   VMEM scratch: transformed activations
    """
    # Compute the transform once per M-tile (first vocab tile only).
    @pl.when(pl.program_id(1) == 0)
    def _():
        # Dense: bf16 inputs, f32 accumulation on the MXU.
        h = jnp.dot(x_ref[...], w1_ref[...], preferred_element_type=jnp.float32)
        h = h + b1_ref[...]
        # BERT "gelu": 0.5 * x * (1 + erf(x / sqrt(2)))  (f32, EUP/VPU)
        h = 0.5 * h * (1.0 + jax.lax.erf(h / _SQRT2))
        # LayerNorm over the hidden (lane) dim, f32 math.
        mean = jnp.mean(h, axis=-1, keepdims=True)
        var = jnp.mean(jnp.square(h - mean), axis=-1, keepdims=True)
        h = (h - mean) * jax.lax.rsqrt(var + LAYER_NORM_EPS)
        h = h * gamma_ref[...] + beta_ref[...]
        # Store bf16 so the decoder matmul runs with bf16 MXU inputs.
        h_ref[...] = h.astype(h_ref.dtype)

    # Decoder tile: [tm, H] @ [H, tv] (+ bias), f32 accumulate.
    scores = jnp.dot(h_ref[...], wd_ref[...], preferred_element_type=jnp.float32)
    o_ref[...] = (scores + dbias_ref[...]).astype(o_ref.dtype)


def _round_up(x, m):
    return (x + m - 1) // m * m


def bert_only_mlm_head(sequence_output, params, *, tm=256, tv=512,
                       out_dtype=jnp.float32):
    """sequence_output: [B, S, H]. Returns prediction scores [B, S, V]."""
    B, S, H = sequence_output.shape
    M = B * S
    V = params["decoder_w"].shape[0]

    # Host-side parameter prep: pre-transpose, bf16 for matmul operands only.
    w1_t = params["dense_w"].T.astype(jnp.bfloat16)          # [H, H]
    b1 = params["dense_b"].reshape(1, H).astype(jnp.float32)
    gamma = params["ln_gamma"].reshape(1, H).astype(jnp.float32)
    beta = params["ln_beta"].reshape(1, H).astype(jnp.float32)
    wd_t = params["decoder_w"].T.astype(jnp.bfloat16)         # [H, V]
    dbias = params["decoder_bias"].reshape(1, V).astype(jnp.float32)

    # Tile sizing: if the dim is smaller than the tile, use the full dim
    # (block == full array dim satisfies the (8,128) rule); otherwise pad up.
    tm_ = M if M <= tm else tm
    tv_ = V if V <= tv else tv
    Mp = _round_up(M, tm_)
    Vp = _round_up(V, tv_)

    x2d = sequence_output.reshape(M, H).astype(jnp.bfloat16)
    if Mp != M:
        x2d = jnp.pad(x2d, ((0, Mp - M), (0, 0)))
    if Vp != V:
        wd_t = jnp.pad(wd_t, ((0, 0), (0, Vp - V)))
        dbias = jnp.pad(dbias, ((0, 0), (0, Vp - V)))

    grid = (Mp // tm_, Vp // tv_)

    out_itemsize = jnp.dtype(out_dtype).itemsize
    cost = pl.CostEstimate(
        flops=2 * Mp * H * H + 2 * Mp * H * Vp,
        transcendentals=Mp * H,
        bytes_accessed=(Mp * H * 2              # x (bf16)
                        + H * H * 2             # dense weight (bf16)
                        + H * Vp * 2            # decoder weight (bf16)
                        + 4 * H * 4 + Vp * 4    # biases / LN params
                        + Mp * Vp * out_itemsize),
    )

    scores = pl.pallas_call(
        _fused_mlm_head_kernel,
        out_shape=jax.ShapeDtypeStruct((Mp, Vp), out_dtype),
        grid_spec=pltpu.PrefetchScalarGridSpec(
            num_scalar_prefetch=0,
            grid=grid,
            in_specs=[
                pl.BlockSpec((tm_, H), lambda i, j: (i, 0)),   # x tile
                pl.BlockSpec((H, H), lambda i, j: (0, 0)),     # dense W^T (resident)
                pl.BlockSpec((1, H), lambda i, j: (0, 0)),     # dense bias
                pl.BlockSpec((1, H), lambda i, j: (0, 0)),     # LN gamma
                pl.BlockSpec((1, H), lambda i, j: (0, 0)),     # LN beta
                pl.BlockSpec((H, tv_), lambda i, j: (0, j)),   # decoder W^T slab
                pl.BlockSpec((1, tv_), lambda i, j: (0, j)),   # decoder bias slab
            ],
            out_specs=pl.BlockSpec((tm_, tv_), lambda i, j: (i, j)),
            scratch_shapes=[pltpu.VMEM((tm_, H), jnp.bfloat16)],
        ),
        compiler_params=pltpu.CompilerParams(
            dimension_semantics=("parallel", "arbitrary"),
        ),
        cost_estimate=cost,
    )(x2d, w1_t, b1, gamma, beta, wd_t, dbias)

    return scores[:M, :V].reshape(B, S, V)


def init_params(key, hidden_size, vocab_size):
    k1, k2, k3 = jax.random.split(key, 3)
    scale = 0.02
    return {
        "dense_w": scale * jax.random.normal(k1, (hidden_size, hidden_size), jnp.float32),
        "dense_b": scale * jax.random.normal(k2, (hidden_size,), jnp.float32),
        "ln_gamma": jnp.ones((hidden_size,), jnp.float32),
        "ln_beta": jnp.zeros((hidden_size,), jnp.float32),
        "decoder_w": scale * jax.random.normal(k3, (vocab_size, hidden_size), jnp.float32),
        "decoder_bias": jnp.zeros((vocab_size,), jnp.float32),
    }


def _reference(x, p):
    """Pure-f32 reference matching the PyTorch module semantics."""
    h = x @ p["dense_w"].T + p["dense_b"]
    h = 0.5 * h * (1.0 + jax.lax.erf(h / _SQRT2))
    mean = jnp.mean(h, axis=-1, keepdims=True)
    var = jnp.mean((h - mean) ** 2, axis=-1, keepdims=True)
    h = (h - mean) * jax.lax.rsqrt(var + LAYER_NORM_EPS)
    h = h * p["ln_gamma"] + p["ln_beta"]
    return h @ p["decoder_w"].T + p["decoder_bias"]


if __name__ == "__main__":
    B, S, H, V = 2, 8, 32, 256
    key = jax.random.PRNGKey(0)
    kx, kp = jax.random.split(key)
    x = jax.random.normal(kx, (B, S, H), jnp.float32)
    params = init_params(kp, H, V)

    out = bert_only_mlm_head(x, params)
    out = jax.block_until_ready(out)

    ref = _reference(x, params)
    assert out.shape == (B, S, V)
    # bf16 MXU inputs with f32 accumulation -> looser tolerance than pure f32.
    assert jnp.allclose(out, ref, atol=2e-2, rtol=2e-2), (
        float(jnp.max(jnp.abs(out - ref))))
    print("KERNEL_OK")
</pallas_src>

<mosaic_0001>
module attributes {stable_mosaic.version = 11 : i64} {
  func.func @_fused_mlm_head_kernel(%arg0: i32, %arg1: i32, %arg2: memref<16x32xbf16, #tpu.memory_space<vmem>>, %arg3: memref<32x32xbf16, #tpu.memory_space<vmem>>, %arg4: memref<1x32xf32, #tpu.memory_space<vmem>>, %arg5: memref<1x32xf32, #tpu.memory_space<vmem>>, %arg6: memref<1x32xf32, #tpu.memory_space<vmem>>, %arg7: memref<32x256xbf16, #tpu.memory_space<vmem>>, %arg8: memref<1x256xf32, #tpu.memory_space<vmem>>, %arg9: memref<16x256xf32, #tpu.memory_space<vmem>>, %arg10: memref<16x32xbf16, #tpu.memory_space<vmem>>) attributes {dimension_semantics = [#tpu.dimension_semantics<parallel>, #tpu.dimension_semantics<arbitrary>], iteration_bounds = array<i64: 1, 1>, scalar_prefetch = 0 : i64, scratch_operands = 1 : i64, tpu.core_type = #tpu.core_type<tc>, window_params = [{transform_indices = @transform_0, window_bounds = array<i64: 16, 32>}, {pipeline_mode = #tpu.pipeline_mode<synchronous>, transform_indices = @transform_1, window_bounds = array<i64: 32, 32>}, {pipeline_mode = #tpu.pipeline_mode<synchronous>, transform_indices = @transform_2, window_bounds = array<i64: 1, 32>}, {pipeline_mode = #tpu.pipeline_mode<synchronous>, transform_indices = @transform_3, window_bounds = array<i64: 1, 32>}, {pipeline_mode = #tpu.pipeline_mode<synchronous>, transform_indices = @transform_4, window_bounds = array<i64: 1, 32>}, {transform_indices = @transform_5, window_bounds = array<i64: 32, 256>}, {transform_indices = @transform_6, window_bounds = array<i64: 1, 256>}, {transform_indices = @transform_7, window_bounds = array<i64: 16, 256>}]} {
    %c0_i32 = arith.constant 0 : i32
    %0 = arith.cmpi eq, %arg1, %c0_i32 : i32
    %1 = arith.extui %0 : i1 to i32
    %c0_i32_0 = arith.constant 0 : i32
    %2 = arith.cmpi ne, %1, %c0_i32_0 : i32
    scf.if %2 {
      %c0_8 = arith.constant 0 : index
      %c0_9 = arith.constant 0 : index
      %10 = vector.load %arg2[%c0_8, %c0_9] : memref<16x32xbf16, #tpu.memory_space<vmem>>, vector<16x32xbf16>
      %c0_10 = arith.constant 0 : index
      %c0_11 = arith.constant 0 : index
      %11 = vector.load %arg3[%c0_10, %c0_11] : memref<32x32xbf16, #tpu.memory_space<vmem>>, vector<32x32xbf16>
      %cst_12 = arith.constant dense<0.000000e+00> : vector<16x32xf32>
      %12 = tpu.matmul %10, %11, %cst_12 {dimension_numbers = #tpu.dot_dimension_numbers<[1], [0], [0], [1], [0, 0, 1, 1], [], []>} : vector<16x32xbf16>, vector<32x32xbf16>, vector<16x32xf32> -> vector<16x32xf32>
      %c0_13 = arith.constant 0 : index
      %c0_14 = arith.constant 0 : index
      %13 = vector.load %arg4[%c0_13, %c0_14] : memref<1x32xf32, #tpu.memory_space<vmem>>, vector<1x32xf32>
      %14 = vector.broadcast %13 : vector<1x32xf32> to vector<16x32xf32>
      %15 = arith.addf %12, %14 : vector<16x32xf32>
      %cst_15 = arith.constant 5.000000e-01 : f32
      %16 = vector.broadcast %cst_15 : f32 to vector<16x32xf32>
      %17 = arith.mulf %16, %15 : vector<16x32xf32>
      %cst_16 = arith.constant 1.41421354 : f32
      %18 = vector.broadcast %cst_16 : f32 to vector<16x32xf32>
      %19 = arith.divf %15, %18 : vector<16x32xf32>
      %20 = math.erf %19 : vector<16x32xf32>
      %cst_17 = arith.constant 1.000000e+00 : f32
      %21 = vector.broadcast %cst_17 : f32 to vector<16x32xf32>
      %22 = arith.addf %21, %20 : vector<16x32xf32>
      %23 = arith.mulf %17, %22 : vector<16x32xf32>
      %cst_18 = arith.constant dense<0.000000e+00> : vector<16xf32>
      %24 = vector.multi_reduction <add>, %23, %cst_18 [1] : vector<16x32xf32> to vector<16xf32>
      %25 = vector.shape_cast %24 : vector<16xf32> to vector<16x1xf32>
      %cst_19 = arith.constant 3.200000e+01 : f32
      %26 = vector.broadcast %cst_19 : f32 to vector<16x1xf32>
      %27 = arith.divf %25, %26 : vector<16x1xf32>
      %28 = vector.broadcast %27 : vector<16x1xf32> to vector<16x32xf32>
      %29 = arith.subf %23, %28 : vector<16x32xf32>
      %30 = arith.mulf %29, %29 : vector<16x32xf32>
      %cst_20 = arith.constant dense<0.000000e+00> : vector<16xf32>
      %31 = vector.multi_reduction <add>, %30, %cst_20 [1] : vector<16x32xf32> to vector<16xf32>
      %32 = vector.shape_cast %31 : vector<16xf32> to vector<16x1xf32>
      %cst_21 = arith.constant 3.200000e+01 : f32
      %33 = vector.broadcast %cst_21 : f32 to vector<16x1xf32>
      %34 = arith.divf %32, %33 : vector<16x1xf32>
      %35 = vector.broadcast %27 : vector<16x1xf32> to vector<16x32xf32>
      %36 = arith.subf %23, %35 : vector<16x32xf32>
      %cst_22 = arith.constant 9.99999996E-13 : f32
      %37 = vector.broadcast %cst_22 : f32 to vector<16x1xf32>
      %38 = arith.addf %34, %37 : vector<16x1xf32>
      %39 = math.rsqrt %38 : vector<16x1xf32>
      %40 = vector.broadcast %39 : vector<16x1xf32> to vector<16x32xf32>
      %41 = arith.mulf %36, %40 : vector<16x32xf32>
      %c0_23 = arith.constant 0 : index
      %c0_24 = arith.constant 0 : index
      %42 = vector.load %arg5[%c0_23, %c0_24] : memref<1x32xf32, #tpu.memory_space<vmem>>, vector<1x32xf32>
      %43 = vector.broadcast %42 : vector<1x32xf32> to vector<16x32xf32>
      %44 = arith.mulf %41, %43 : vector<16x32xf32>
      %c0_25 = arith.constant 0 : index
      %c0_26 = arith.constant 0 : index
      %45 = vector.load %arg6[%c0_25, %c0_26] : memref<1x32xf32, #tpu.memory_space<vmem>>, vector<1x32xf32>
      %46 = vector.broadcast %45 : vector<1x32xf32> to vector<16x32xf32>
      %47 = arith.addf %44, %46 : vector<16x32xf32>
      %48 = arith.truncf %47 : vector<16x32xf32> to vector<16x32xbf16>
      %c0_27 = arith.constant 0 : index
      %c0_28 = arith.constant 0 : index
      %49 = vector.load %arg10[%c0_27, %c0_28] : memref<16x32xbf16, #tpu.memory_space<vmem>>, vector<16x32xbf16>
      tpu.vector_store %arg10[%c0_27, %c0_28], %48 {strides = array<i32>} : memref<16x32xbf16, #tpu.memory_space<vmem>>, vector<16x32xbf16>,
    } else {
    }
    %c0 = arith.constant 0 : index
    %c0_1 = arith.constant 0 : index
    %3 = vector.load %arg10[%c0, %c0_1] : memref<16x32xbf16, #tpu.memory_space<vmem>>, vector<16x32xbf16>
    %c0_2 = arith.constant 0 : index
    %c0_3 = arith.constant 0 : index
    %4 = vector.load %arg7[%c0_2, %c0_3] : memref<32x256xbf16, #tpu.memory_space<vmem>>, vector<32x256xbf16>
    %cst = arith.constant dense<0.000000e+00> : vector<16x256xf32>
    %5 = tpu.matmul %3, %4, %cst {dimension_numbers = #tpu.dot_dimension_numbers<[1], [0], [0], [1], [0, 0, 1, 1], [], []>} : vector<16x32xbf16>, vector<32x256xbf16>, vector<16x256xf32> -> vector<16x256xf32>
    %c0_4 = arith.constant 0 : index
    %c0_5 = arith.constant 0 : index
    %6 = vector.load %arg8[%c0_4, %c0_5] : memref<1x256xf32, #tpu.memory_space<vmem>>, vector<1x256xf32>
    %7 = vector.broadcast %6 : vector<1x256xf32> to vector<16x256xf32>
    %8 = arith.addf %5, %7 : vector<16x256xf32>
    %c0_6 = arith.constant 0 : index
    %c0_7 = arith.constant 0 : index
    %9 = vector.load %arg9[%c0_6, %c0_7] : memref<16x256xf32, #tpu.memory_space<vmem>>, vector<16x256xf32>
    tpu.vector_store %arg9[%c0_6, %c0_7], %8 {strides = array<i32>} : memref<16x256xf32, #tpu.memory_space<vmem>>, vector<16x256xf32>,
    return
  }
  func.func @transform_0(%arg0: i32, %arg1: i32) -> (i32, i32) {
    %c0_i32 = arith.constant 0 : i32
    %c0_i32_0 = arith.constant 0 : i32
    return %arg0, %c0_i32 : i32, i32
  }
  func.func @transform_1(%arg0: i32, %arg1: i32) -> (i32, i32) {
    %c0_i32 = arith.constant 0 : i32
    %c0_i32_0 = arith.constant 0 : i32
    %c0_i32_1 = arith.constant 0 : i32
    return %c0_i32, %c0_i32_0 : i32, i32
  }
  func.func @transform_2(%arg0: i32, %arg1: i32) -> (i32, i32) {
    %c0_i32 = arith.constant 0 : i32
    %c0_i32_0 = arith.constant 0 : i32
    %c0_i32_1 = arith.constant 0 : i32
    return %c0_i32, %c0_i32_0 : i32, i32
  }
  func.func @transform_3(%arg0: i32, %arg1: i32) -> (i32, i32) {
    %c0_i32 = arith.constant 0 : i32
    %c0_i32_0 = arith.constant 0 : i32
    %c0_i32_1 = arith.constant 0 : i32
    return %c0_i32, %c0_i32_0 : i32, i32
  }
  func.func @transform_4(%arg0: i32, %arg1: i32) -> (i32, i32) {
    %c0_i32 = arith.constant 0 : i32
    %c0_i32_0 = arith.constant 0 : i32
    %c0_i32_1 = arith.constant 0 : i32
    return %c0_i32, %c0_i32_0 : i32, i32
  }
  func.func @transform_5(%arg0: i32, %arg1: i32) -> (i32, i32) {
    %c0_i32 = arith.constant 0 : i32
    %c0_i32_0 = arith.constant 0 : i32
    return %c0_i32, %arg1 : i32, i32
  }
  func.func @transform_6(%arg0: i32, %arg1: i32) -> (i32, i32) {
    %c0_i32 = arith.constant 0 : i32
    %c0_i32_0 = arith.constant 0 : i32
    return %c0_i32, %arg1 : i32, i32
  }
  func.func @transform_7(%arg0: i32, %arg1: i32) -> (i32, i32) {
    %c0_i32 = arith.constant 0 : i32
    return %arg0, %arg1 : i32, i32
  }
}

</mosaic_0001>

<llo_original>
// kernel: tpu_custom_call.1
$region0: #{tpu_custom_call.1}
  #allocation0 [shape = 'u32[]', space=smem, size = 0x4, offset = 0x4, fixed_abs, tag = 'smem constant byte address 0x4 - core index']
  #allocation1 [shape = 'u32[144,128]{1,0:T(1,128)}', space=vmem, size = 0x12000, scoped, tag = 'internal scratch']
  #allocation2 [shape = 'bf16[16,32]{1,0:T(16,128)(2,1)}', space=vmem, size = 0x1000, scoped, tag = 'scratch operand']
  %s0 = inlined_call_operand.hbm [shape: bf16[16,32], index: 0, kind: input, shape index: {}]
  %s1 = inlined_call_operand.hbm [shape: bf16[32,32], index: 1, kind: input, shape index: {}]
  %s2 = inlined_call_operand.vmem [shape: f32[1,32], index: 2, kind: input, shape index: {}]
  %s3 = inlined_call_operand.vmem [shape: f32[1,32], index: 3, kind: input, shape index: {}]
  %s4 = inlined_call_operand.vmem [shape: f32[1,32], index: 4, kind: input, shape index: {}]
  %s5 = inlined_call_operand.hbm [shape: bf16[32,256], index: 5, kind: input, shape index: {}]
  %s6 = inlined_call_operand.vmem [shape: f32[1,256], index: 6, kind: input, shape index: {}]
  %s7 = inlined_call_operand.hbm [shape: f32[16,256], index: 7, kind: output, shape index: {}]
  %s8 = sld [smem:[#allocation0]]
  $region54: #{tpu_custom_call.1} parent=0
    _
  %s10 = ssub.s32 1, %s8
  %s11 = scalar_select 0, %s10, %s8
  $region1: #{tpu_custom_call.1} parent=0
    #allocation3 [shape = 'u8[4096]{0}', space=vmem, size = 0x1000, scoped, tag = 'input window, operand 0, single buffered']
    #allocation4 [shape = 's32[1]{0}', space=sflag, size = 0x4, scoped, tag = 'scoped memory for tpu_custom_call.1']
    #allocation5 [shape = 's32[1]{0}', space=sflag, size = 0x4, scoped, tag = 'scoped memory for tpu_custom_call.1']
    #allocation6 [shape = 'u8[8192]{0}', space=vmem, size = 0x2000, scoped, tag = 'input window, operand 1, single buffered']
    #allocation7 [shape = 's32[1]{0}', space=sflag, size = 0x4, scoped, tag = 'scoped memory for tpu_custom_call.1']
    #allocation8 [shape = 'u8[16384]{0}', space=vmem, size = 0x4000, scoped, tag = 'input window, operand 5, single buffered']
    #allocation9 [shape = 'u8[16384]{0}', space=vmem, size = 0x4000, scoped, tag = 'output window, operand 0, single buffered']
    %12 = vsyncpa [#allocation4], 0
    %13 = vsyncpa [#allocation7], 0
    %14 = vsyncpa [#allocation5], 0
    // Predicated region
    $region2: #{tpu_custom_call.1} parent=1 // pred_check
      _
    $region3: #{tpu_custom_call.1} parent=1 // pred_check_branch
      %16 = sbr.rel (0) target = $region5
    $region4: #{tpu_custom_call.1} parent=1 // pred_region
      %s18 = ssub.s32 128, 128
      %19 = vsyncadd [#allocation4], %s18
      %s20 = sshll.u32 [#allocation3], 4
      %s21 = int_to_ptr.vmem [resolvable:$true] %s20
      %26 = dma.hbm_to_vmem [thread:$0]  %s0, 128, %s21, [#allocation4], 64, 64, 4
    $region5: #{tpu_custom_call.1} parent=1 // pred_fallthru
      _
    // Predicated region
    $region6: #{tpu_custom_call.1} parent=1 // pred_check
      _
    $region7: #{tpu_custom_call.1} parent=1 // pred_check_branch
      %28 = sbr.rel (0) target = $region9
    $region8: #{tpu_custom_call.1} parent=1 // pred_region
      %s30 = ssub.s32 256, 256
      %31 = vsyncadd [#allocation7], %s30
      %s32 = sshll.u32 [#allocation6], 4
      %s33 = int_to_ptr.vmem [resolvable:$true] %s32
      %38 = dma.hbm_to_vmem [thread:$0]  %s1, 256, %s33, [#allocation7], 64, 64, 4
    $region9: #{tpu_custom_call.1} parent=1 // pred_fallthru
      _
    // Predicated region
    $region10: #{tpu_custom_call.1} parent=1 // pred_check
      _
    $region11: #{tpu_custom_call.1} parent=1 // pred_check_branch
      %40 = sbr.rel (0) target = $region13
    $region12: #{tpu_custom_call.1} parent=1 // pred_region
      _
    $region13: #{tpu_custom_call.1} parent=1 // pred_fallthru
      _
    // Predicated region
    $region14: #{tpu_custom_call.1} parent=1 // pred_check
      _
    $region15: #{tpu_custom_call.1} parent=1 // pred_check_branch
      %42 = sbr.rel (0) target = $region17
    $region16: #{tpu_custom_call.1} parent=1 // pred_region
      _
    $region17: #{tpu_custom_call.1} parent=1 // pred_fallthru
      _
    // Predicated region
    $region18: #{tpu_custom_call.1} parent=1 // pred_check
      _
    $region19: #{tpu_custom_call.1} parent=1 // pred_check_branch
      %44 = sbr.rel (0) target = $region21
    $region20: #{tpu_custom_call.1} parent=1 // pred_region
      _
    $region21: #{tpu_custom_call.1} parent=1 // pred_fallthru
      _
    // Predicated region
    $region22: #{tpu_custom_call.1} parent=1 // pred_check
      _
    $region23: #{tpu_custom_call.1} parent=1 // pred_check_branch
      %46 = sbr.rel (0) target = $region25
    $region24: #{tpu_custom_call.1} parent=1 // pred_region
      %s48 = ssub.s32 512, 512
      %49 = vsyncadd [#allocation7], %s48
      %s50 = sshll.u32 [#allocation8], 4
      %s51 = int_to_ptr.vmem [resolvable:$true] %s50
      %56 = dma.hbm_to_vmem [thread:$0]  %s5, 512, %s51, [#allocation7], 128, 128, 8
    $region25: #{tpu_custom_call.1} parent=1 // pred_fallthru
      _
    // Predicated region
    $region26: #{tpu_custom_call.1} parent=1 // pred_check
      _
    $region27: #{tpu_custom_call.1} parent=1 // pred_check_branch
      %58 = sbr.rel (0) target = $region29
    $region28: #{tpu_custom_call.1} parent=1 // pred_region
      _
    $region29: #{tpu_custom_call.1} parent=1 // pred_fallthru
      _
    // Predicated region
    $region30: #{tpu_custom_call.1} parent=1 // pred_check
      _
    $region31: #{tpu_custom_call.1} parent=1 // pred_check_branch
      %60 = sbr.rel (0) target = $region33
    $region32: #{tpu_custom_call.1} parent=1 // pred_region
      %61 = dma.done [#allocation4], 128
    $region33: #{tpu_custom_call.1} parent=1 // pred_fallthru
      _
    // Predicated region
    $region34: #{tpu_custom_call.1} parent=1 // pred_check
      _
    $region35: #{tpu_custom_call.1} parent=1 // pred_check_branch
      %63 = sbr.rel (0) target = $region37
    $region36: #{tpu_custom_call.1} parent=1 // pred_region
      %64 = dma.done [#allocation7], 256
    $region37: #{tpu_custom_call.1} parent=1 // pred_fallthru
      _
    // Predicated region
    $region38: #{tpu_custom_call.1} parent=1 // pred_check
      _
    $region39: #{tpu_custom_call.1} parent=1 // pred_check_branch
      %66 = sbr.rel (0) target = $region41
    $region40: #{tpu_custom_call.1} parent=1 // pred_region
      %67 = dma.done [#allocation7], 512
    $region41: #{tpu_custom_call.1} parent=1 // pred_fallthru
      _
    %p69 = scmp.eq.s32.totalorder 0, 0
    // Predicated region
    $region42: #{tpu_custom_call.1} parent=1 // pred_check
      %p70 = pneg %p69
    $region43: #{tpu_custom_call.1} parent=1 // pred_check_branch
      %72 = sbr.rel (%p70) target = $region45
    $region44: #{tpu_custom_call.1} parent=1 // pred_region
      %v73 = vld [vmem:[#allocation3] sm:$0xf]
      %v74 = vld [vmem:[#allocation3 + $0x4] sm:$0xf]
      %v75 = vld [vmem:[#allocation6] sm:$0xf]
      %v76 = vld [vmem:[#allocation6 + $0x4] sm:$0xf]
      %v77 = vld [vmem:[#allocation6 + $0x8] sm:$0xf]
      %v78 = vld [vmem:[#allocation6 + $0xc] sm:$0xf]
      %v79 = vld [vmem:[%s2] sm:$0x1]
      %v81 = vlaneseq
      %v82 = vshrl.u32 %v81, 7
      %v83 = vsub.s32 0, %v82
      %v84 = vrot.slane %v79, %v83
      %v88 = vunpack.c.l.b16 %v73
      %v89 = vunpack.c.l.b16 %v74
      %v90 = vpack.c.b16 %v89, %v88
      %v95 = vunpack.c.l.b16 %v75
      %v96 = vunpack.c.l.b16 %v76
      %v97 = vunpack.c.l.b16 %v77
      %v98 = vunpack.c.l.b16 %v78
      %v99 = vpack.c.b16 %v96, %v95
      %v100 = vpack.c.b16 %v98, %v97
      %vm103 = vcmask 261120
      %v105 = vsel %vm103, %v90, 0
      %107 = vmatprep.subr.bf16.mxu0 0
      %108 = vmatpush1.bf16.msra.mxu0 %v99
      %109 = vmatprep.subr.bf16.mxu0 0
      %110 = vmatpush1.bf16.msra.mxu0 %v100
      %111 = vmatprep.subr.bf16.mxu0 0
      %112 = vmatpush1.bf16.msra.mxu0 0
      %113 = vmatprep.subr.bf16.mxu0 0
      %114 = vmatpush1.bf16.msra.mxu0 0
      %115 = vmatprep.subr.bf16.mxu0 0
      %116 = vmatpush1.bf16.msra.mxu0 0
      %117 = vmatprep.subr.bf16.mxu0 0
      %118 = vmatpush1.bf16.msra.mxu0 0
      %119 = vmatprep.subr.bf16.mxu0 0
      %120 = vmatpush1.bf16.msra.mxu0 0
      %121 = vmatprep.subr.bf16.mxu0 0
      %122 = vmatpush1.bf16.msra.mxu0 0
      %123 = vmatprep.subr.bf16.mxu0 0
      %124 = vmatpush1.bf16.msra.mxu0 0
      %125 = vmatprep.subr.bf16.mxu0 0
      %126 = vmatpush1.bf16.msra.mxu0 0
      %127 = vmatprep.subr.bf16.mxu0 0
      %128 = vmatpush1.bf16.msra.mxu0 0
      %129 = vmatprep.subr.bf16.mxu0 0
      %130 = vmatpush1.bf16.msra.mxu0 0
      %131 = vmatprep.subr.bf16.mxu0 0
      %132 = vmatpush1.bf16.msra.mxu0 0
      %133 = vmatprep.subr.bf16.mxu0 0
      %134 = vmatpush1.bf16.msra.mxu0 0
      %135 = vmatprep.subr.bf16.mxu0 0
      %136 = vmatpush1.bf16.msra.mxu0 0
      %137 = vmatprep.subr.bf16.mxu0 0
      %138 = vmatpush1.bf16.msra.mxu0 0
      %139 = vmatprep.mubr.bf16.mxu0 0
      %140 = vmatmul.mubr.bf16.gmra.mrb[0].mxu0 %v105
      %v141 = vpop.f32.mrb[0].mxu0
      %v142 = vadd.f32 %v84, %v141
      %v143 = vpop.f32.mrb[0].mxu0
      %v144 = vpop.f32.mrb[0].mxu0
      %v145 = vadd.f32 %v84, %v144
      %v146 = vpop.f32.mrb[0].mxu0
      %147 = vdwg.mxu0
      %v148 = vmul.f32 %v142, 0.5
      %v149 = vmul.f32 %v145, 0.5
      %v150 = vrcp.pop 1.4142135
      %v151 = vmul.f32 %v142, %v150
      %v152 = vmul.f32 %v145, %v150
      %v153 = verf.f32.pop %v151
      %v154 = verf.f32.pop %v152
      %v155 = vadd.f32 %v153, 1.0
      %v156 = vadd.f32 %v154, 1.0
      %v157 = vmul.f32 %v148, %v155
      %v158 = vmul.f32 %v149, %v156
      %v159 = vsel %vm103, %v157, 0.0
      %160 = vadd.xlane.f32.xlu0 %v159
      %v161 = vpop.xlane.xlu0 %160
      %v162 = vsel %vm103, %v158, 0.0
      %163 = vadd.xlane.f32.xlu0 %v162
      %v164 = vpop.xlane.xlu0 %163
      %v165 = vrcp.pop 32.0
      %v166 = vmul.f32 %v161, %v165
      %v167 = vmul.f32 %v164, %v165
      %v168 = vsub.f32 %v157, %v166
      %v169 = vsub.f32 %v158, %v167
      %v170 = vmul.f32 %v168, %v168
      %v171 = vmul.f32 %v169, %v169
      %v172 = vsel %vm103, %v170, 0.0
      %173 = vadd.xlane.f32.xlu0 %v172
      %v174 = vpop.xlane.xlu0 %173
      %v175 = vsel %vm103, %v171, 0.0
      %176 = vadd.xlane.f32.xlu0 %v175
      %v177 = vpop.xlane.xlu0 %176
      %v178 = vmul.f32 %v174, %v165
      %v179 = vmul.f32 %v177, %v165
      %v180 = vadd.f32 %v178, 1e-12
      %v181 = vadd.f32 %v179, 1e-12
      %v182 = vrsqrt.pop %v180
      %v183 = vrsqrt.pop %v181
      %v184 = vmul.f32 %v168, %v182
      %v185 = vmul.f32 %v169, %v183
      %v186 = vld [vmem:[%s3] sm:$0x1]
      %v188 = vlaneseq
      %v189 = vshrl.u32 %v188, 7
      %v190 = vsub.s32 0, %v189
      %v191 = vrot.slane %v186, %v190
      %v193 = vmul.f32 %v184, %v191
      %v194 = vmul.f32 %v185, %v191
      %v195 = vld [vmem:[%s4] sm:$0x1]
      %v197 = vlaneseq
      %v198 = vshrl.u32 %v197, 7
      %v199 = vsub.s32 0, %v198
      %v200 = vrot.slane %v195, %v199
      %v202 = vadd.f32 %v193, %v200
      %v203 = vadd.f32 %v194, %v200
      %v204 = vpack.c.bf16 %v203, %v202
      %205 = vst.msk [vmem:[#allocation2] sm:$0xff] %vm103, %v204
    $region45: #{tpu_custom_call.1} parent=1 // pred_fallthru
      _
    %v206 = vld [vmem:[#allocation2] sm:$0xff]
    %v207 = vld [vmem:[#allocation8] sm:$0xff]
    %v208 = vld [vmem:[#allocation8 + $0x8] sm:$0xff]
    %v209 = vld [vmem:[#allocation8 + $0x10] sm:$0xff]
    %v210 = vld [vmem:[#allocation8 + $0x18] sm:$0xff]
    %v211 = vld [vmem:[%s6] sm:$0x3]
    %v213 = vlaneseq
    %v214 = vshrl.u32 %v213, 7
    %v215 = vsub.s32 0, %v214
    %v216 = vrot.slane %v211, %v215
    %v217 = vlaneseq
    %v218 = vshrl.u32 %v217, 7
    %v219 = vsub.s32 1, %v218
    %v220 = vrot.slane %v211, %v219
    %v227 = vunpack.c.l.b16 %v207
    %v228 = vunpack.c.h.b16 %v207
    %v229 = vunpack.c.l.b16 %v208
    %v230 = vunpack.c.h.b16 %v208
    %v231 = vunpack.c.l.b16 %v209
    %v232 = vunpack.c.h.b16 %v209
    %v233 = vunpack.c.l.b16 %v210
    %v234 = vunpack.c.h.b16 %v210
    %v235 = vpack.c.b16 %v229, %v227
    %v236 = vpack.c.b16 %v230, %v228
    %v237 = vpack.c.b16 %v233, %v231
    %v238 = vpack.c.b16 %v234, %v232
    %vm243 = vcmask 261120
    %v245 = vsel %vm243, %v206, 0
    %247 = vmatprep.subr.bf16.mxu0 %v236
    %248 = vmatpush1.bf16.msra.mxu0 %v235
    %249 = vmatprep.subr.bf16.mxu0 %v238
    %250 = vmatpush1.bf16.msra.mxu0 %v237
    %251 = vmatprep.subr.bf16.mxu0 0
    %252 = vmatpush1.bf16.msra.mxu0 0
    %253 = vmatprep.subr.bf16.mxu0 0
    %254 = vmatpush1.bf16.msra.mxu0 0
    %255 = vmatprep.subr.bf16.mxu0 0
    %256 = vmatpush1.bf16.msra.mxu0 0
    %257 = vmatprep.subr.bf16.mxu0 0
    %258 = vmatpush1.bf16.msra.mxu0 0
    %259 = vmatprep.subr.bf16.mxu0 0
    %260 = vmatpush1.bf16.msra.mxu0 0
    %261 = vmatprep.subr.bf16.mxu0 0
    %262 = vmatpush1.bf16.msra.mxu0 0
    %263 = vmatprep.subr.bf16.mxu0 0
    %264 = vmatpush1.bf16.msra.mxu0 0
    %265 = vmatprep.subr.bf16.mxu0 0
    %266 = vmatpush1.bf16.msra.mxu0 0
    %267 = vmatprep.subr.bf16.mxu0 0
    %268 = vmatpush1.bf16.msra.mxu0 0
    %269 = vmatprep.subr.bf16.mxu0 0
    %270 = vmatpush1.bf16.msra.mxu0 0
    %271 = vmatprep.subr.bf16.mxu0 0
    %272 = vmatpush1.bf16.msra.mxu0 0
    %273 = vmatprep.subr.bf16.mxu0 0
    %274 = vmatpush1.bf16.msra.mxu0 0
    %275 = vmatprep.subr.bf16.mxu0 0
    %276 = vmatpush1.bf16.msra.mxu0 0
    %277 = vmatprep.subr.bf16.mxu0 0
    %278 = vmatpush1.bf16.msra.mxu0 0
    %279 = vmatprep.mubr.bf16.mxu0 0
    %280 = vmatmul.mubr.bf16.gmra.mrb[0].mxu0 %v245
    %v281 = vpop.f32.mrb[0].mxu0
    %v282 = vadd.f32 %v216, %v281
    %v283 = vpop.f32.mrb[0].mxu0
    %v284 = vadd.f32 %v220, %v283
    %v285 = vpop.f32.mrb[0].mxu0
    %v286 = vadd.f32 %v216, %v285
    %v287 = vpop.f32.mrb[0].mxu0
    %v288 = vadd.f32 %v220, %v287
    %289 = vdwg.mxu0
    %290 = vst [vmem:[#allocation9] sm:$0xff] %v282
    %291 = vst [vmem:[#allocation9 + $0x8] sm:$0xff] %v284
    %292 = vst [vmem:[#allocation9 + $0x10] sm:$0xff] %v286
    %293 = vst [vmem:[#allocation9 + $0x18] sm:$0xff] %v288
    // Predicated region
    $region46: #{tpu_custom_call.1} parent=1 // pred_check
      _
    $region47: #{tpu_custom_call.1} parent=1 // pred_check_branch
      %295 = sbr.rel (0) target = $region49
    $region48: #{tpu_custom_call.1} parent=1 // pred_region
      %s297 = ssub.s32 512, 512
      %298 = vsyncadd [#allocation5], %s297
      %s299 = sshll.u32 [#allocation9], 4
      %s300 = int_to_ptr.vmem [resolvable:$true] %s299
      %305 = dma.vmem_to_hbm [thread:$0]  %s300, 512, %s7, [#allocation5], 256, 256, 16
    $region49: #{tpu_custom_call.1} parent=1 // pred_fallthru
      _
    // Predicated region
    $region50: #{tpu_custom_call.1} parent=1 // pred_check
      _
    $region51: #{tpu_custom_call.1} parent=1 // pred_check_branch
      %307 = sbr.rel (0) target = $region53
    $region52: #{tpu_custom_call.1} parent=1 // pred_region
      %308 = dma.done [#allocation5], 512
    $region53: #{tpu_custom_call.1} parent=1 // pred_fallthru
      _
    %309 = vsyncpa [#allocation4], 1
    %310 = vsyncpa [#allocation7], 1
    %311 = vsyncpa [#allocation5], 1

</llo_original>
